<compile_context>
chip_gen: v7x
topology: tpu7x:2x2x1
jax: 0.10.0
libtpu: 0.0.40
codegen_flags: <defaults>
</compile_context>

<pallas_src>
import functools
import math

import jax
import jax.numpy as jnp
from jax import lax
from jax.experimental import pallas as pl
from jax.experimental.pallas import tpu as pltpu

_SQRT2 = math.sqrt(2.0)


def _gelu(x):
    # exact (erf) GELU == torch.nn.GELU() default.
    # TODO(synk): on v5e (no bf16 VPU) jax.nn.gelu(approximate=True) would push
    # the big conv activation onto the EUP slot, at a small numerical delta.
    return 0.5 * x * (1.0 + lax.erf(x / _SQRT2))


def _layernorm(x, gamma, beta, eps=1e-5):
    mean = jnp.mean(x, axis=-1, keepdims=True)
    var = jnp.mean(jnp.square(x - mean), axis=-1, keepdims=True)
    return (x - mean) * lax.rsqrt(var + eps) * gamma + beta


# rows of the packed per-channel vector operand (width H)
_BC, _LN1_G, _LN1_B = 0, 1, 2
_NUM_VEC_ROWS = 3


def _tile_rows(x, reps):
    """Replicate a [R, H] block `reps` times along rows -> [reps*R, H]."""
    if reps == 1:
        return x
    r, h = x.shape
    return jnp.broadcast_to(x[None], (reps, r, h)).reshape(reps * r, h)


# --------------------------------------------------------------------------
# Fused kernel (hidden_state present): one grid step handles Bb batch elements.
# --------------------------------------------------------------------------
def _fused_kernel(Bb, N, D, H, hs_ref, tproj_ref, node_ref, gpre_ref, wc_ref,
                  wgb_ref, w1a_ref, w2_ref, vec_ref, b2_ref, out_ref,
                  hbuf, hmean_ref):
    f32, bf16 = jnp.float32, jnp.bfloat16
    bc = vec_ref[_BC:_BC + 1, :]
    ln1_g = vec_ref[_LN1_G:_LN1_G + 1, :]
    ln1_b = vec_ref[_LN1_B:_LN1_B + 1, :]
    inv_d = 1.0 / D

    # ---- 1x1 conv (BN folded) + GELU + mean over D, one batch at a time ----
    # hs block is the native NCHW layout [Bb, E, N*D] (row m = n*D + d), so the
    # E-contraction is a transposed-LHS dot with M = N*D; no glue transpose and
    # no [E, Bb*N*D] lane-axis concat.
    for bb in range(Bb):
        x = hs_ref[bb].astype(bf16)                                   # [E, N*D]
        h = lax.dot_general(x, wc_ref[...],
                            dimension_numbers=(((0,), (0,)), ((), ())),
                            preferred_element_type=f32)               # [N*D, H]
        hbuf[...] = _gelu(h + bc)
        # mean over D: D strided sublane reads of the per-batch scratch
        acc = hbuf[pl.ds(0, N, stride=D), :]
        for d in range(1, D):
            acc = acc + hbuf[pl.ds(d, N, stride=D), :]
        hmean_ref[pl.ds(bb * N, N), :] = acc * inv_d                  # [N, H]
    hmean = hmean_ref[...]                                            # [Bb*N, H]

    # ---- fusion gate (node @ wga + bg hoisted to glue as gpre) --------------
    node_rep = _tile_rows(node_ref[...], Bb)
    logits = _tile_rows(gpre_ref[...], Bb) + jnp.dot(
        hmean.astype(bf16), wgb_ref[...], preferred_element_type=f32)
    gate = jax.nn.sigmoid(logits)
    fused = gate * node_rep + (1.0 - gate) * hmean                    # [Bb*N, H]

    # ---- output projection (text half hoisted to glue: tproj = t@w1b + b1) --
    y = jnp.dot(fused.astype(bf16), w1a_ref[...], preferred_element_type=f32)
    if Bb == 1:
        y = y + jnp.broadcast_to(tproj_ref[0], (N, H))
    else:
        y = y + jnp.broadcast_to(tproj_ref[...], (Bb, N, H)).reshape(Bb * N, H)
    y = _gelu(_layernorm(y, ln1_g, ln1_b))
    out = jnp.dot(y.astype(bf16), w2_ref[...],
                  preferred_element_type=f32) + b2_ref[...]           # [Bb*N, D]

    # single-shot store.
    # TODO(synk): if the epilogue ever becomes store-bound (D << 128), present a
    # lane-dense (Bb, N*D) output instead; needs a sublane->lane relayout.
    if Bb == 1:
        out_ref[0] = out
    else:
        out_ref[...] = out.reshape(Bb, N, D)


# --------------------------------------------------------------------------
# Kernel for the hidden_state=None path (no gate / conv).  node @ w1a and the
# text half are hoisted to glue; only the add + LN + GELU + final matmul stay.
# --------------------------------------------------------------------------
def _nohs_kernel(Bb, N, D, H, tproj_ref, base_ref, w2_ref, vec_ref, b2_ref,
                 out_ref):
    f32, bf16 = jnp.float32, jnp.bfloat16
    ln1_g = vec_ref[_LN1_G:_LN1_G + 1, :]
    ln1_b = vec_ref[_LN1_B:_LN1_B + 1, :]

    if Bb == 1:
        y = base_ref[...] + jnp.broadcast_to(tproj_ref[0], (N, H))
    else:
        y = _tile_rows(base_ref[...], Bb) + jnp.broadcast_to(
            tproj_ref[...], (Bb, N, H)).reshape(Bb * N, H)
    y = _gelu(_layernorm(y, ln1_g, ln1_b))
    out = jnp.dot(y.astype(bf16), w2_ref[...],
                  preferred_element_type=f32) + b2_ref[...]           # [Bb*N, D]
    if Bb == 1:
        out_ref[0] = out
    else:
        out_ref[...] = out.reshape(Bb, N, D)


def init_params(key, cfg):
    N = cfg['num_nodes']; D = cfg['output_dim']
    H = cfg['hidden_dim']; E = cfg['embed_dim']
    keys = jax.random.split(key, 16)

    def w(k, shape):
        scale = 1.0 / math.sqrt(shape[0])
        return jax.random.normal(k, shape, jnp.float32) * scale

    eps = 1e-5
    bn_gamma = 1.0 + 0.1 * jax.random.normal(keys[10], (H,), jnp.float32)
    bn_beta = 0.1 * jax.random.normal(keys[11], (H,), jnp.float32)
    bn_mean = 0.1 * jax.random.normal(keys[12], (H,), jnp.float32)
    bn_var = jnp.abs(jax.random.normal(keys[13], (H,), jnp.float32)) + 0.5
    bn_scale = bn_gamma / jnp.sqrt(bn_var + eps)
    bn_shift = bn_beta - bn_mean * bn_scale

    return {
        # text_processor
        'wt': w(keys[0], (H, H)), 'bt': w(keys[1], (1, H)),
        'lnt_g': jnp.ones((1, H), jnp.float32), 'lnt_b': jnp.zeros((1, H), jnp.float32),
        # node embeddings (position_ids == arange(N) for every batch element)
        'node_emb': jax.random.normal(keys[2], (N, H), jnp.float32) * 0.5,
        # hidden_state_processor (conv weight stored transposed: [E, H])
        'wc': w(keys[3], (E, H)), 'bc': w(keys[4], (1, H)),
        'bn_scale': bn_scale.reshape(1, H), 'bn_shift': bn_shift.reshape(1, H),
        # fusion gate ([2H, H])
        'wg': w(keys[5], (2 * H, H)), 'bg': w(keys[6], (1, H)),
        # output projection
        'w1': w(keys[7], (2 * H, H)), 'b1': w(keys[8], (1, H)),
        'ln1_g': jnp.ones((1, H), jnp.float32), 'ln1_b': jnp.zeros((1, H), jnp.float32),
        'w2': w(keys[9], (H, D)), 'b2': w(keys[14], (1, D)),
    }


def _pick_block_b(B, rows_per_batch, per_batch_bytes, fixed_bytes,
                  target_rows=512, vmem_budget=30 << 20):
    """Largest divisor of B whose matmul row count stays near `target_rows`,
    whose working set fits the VMEM budget, and which keeps grid >= 2 so both
    v7x TensorCores get work (grid is sharded via dimension_semantics)."""
    best = 1
    for c in range(1, B + 1):
        if B % c:
            continue
        if B >= 2 and B // c < 2:
            continue
        if c * rows_per_batch > max(target_rows, rows_per_batch):
            continue
        if fixed_bytes + c * per_batch_bytes > vmem_budget:
            continue
        best = max(best, c)
    return best


def _vmem_limit_bytes(working_set):
    # ~1.5x head-room for compiler temporaries; >= 32 MiB.  Only exceeds the
    # 48 MiB v7x-safe cap if the working set itself demands it (v5e/v6e have
    # 128 MiB physical VMEM, so up to ~100 MiB is fine there).
    return int(min(max(working_set * 3 // 2 + (4 << 20), 32 << 20), 100 << 20))


@functools.partial(jax.jit, static_argnames=('cfg_key',))
def _run(params, text_features, hidden_state, cfg_key):
    cfg = dict(cfg_key)
    p = params
    B = text_features.shape[0]
    N = cfg['num_nodes']; T = cfg['horizon']; D = cfg['output_dim']
    H = cfg['hidden_dim']; E = cfg['embed_dim']
    f32, bf16 = jnp.float32, jnp.bfloat16

    def const_spec(shape):
        # grid-invariant operand: constant block index + single-buffered
        # (pl.Buffered(1)) so it is resident once instead of double-buffered.
        n = len(shape)
        return pl.BlockSpec(shape, lambda i, _n=n: (0,) * _n,
                            pipeline_mode=pl.Buffered(1))

    # ---- glue: batch-only / grid-invariant work (hoisted out of the kernel) -
    # text processor (Linear + LN + GELU; Dropout = identity in eval) and its
    # half of output-projection linear 1:  t_proj = t @ w1b + b1   -> [B, H]
    w1a, w1b = p['w1'][:H], p['w1'][H:]
    t = text_features @ p['wt'] + p['bt']
    t = _gelu(_layernorm(t, p['lnt_g'], p['lnt_b']))
    tproj = (t @ w1b + p['b1']).reshape(B, 1, H)

    # BatchNorm2d (eval) folded into the 1x1 conv.
    bc_f = p['bc'] * p['bn_scale'] + p['bn_shift']                    # [1, H]
    # per-channel vectors needed inside the kernels, packed into one operand
    vec = jnp.concatenate([bc_f, p['ln1_g'], p['ln1_b']], axis=0)     # [3, H]

    out_specs = None  # set per path below
    if hidden_state is not None:
        wc_f = (p['wc'] * p['bn_scale']).astype(bf16)                 # [E, H]
        wga, wgb = p['wg'][:H], p['wg'][H:]
        gpre = p['node_emb'] @ wga + p['bg']                          # [N, H] grid-invariant
        hs = hidden_state.reshape(B, E, N * D)                        # free NCHW reshape

        # working-set estimate (bytes)
        fixed = ((E * H + 2 * H * H + H * D) * 2                      # bf16 weights (x1)
                 + (2 * N * H + _NUM_VEC_ROWS * H + D) * 4            # node, gpre, vec, b2
                 + N * D * H * 4)                                     # hbuf scratch
        per_b = (2 * (E * N * D + H + N * D) + N * H) * 4             # 2x blocks + hmean rows
        Bb = _pick_block_b(B, N * D, per_b, fixed)
        vmem_limit = _vmem_limit_bytes(fixed + Bb * per_b)

        kern = functools.partial(_fused_kernel, Bb, N, D, H)
        out_bnd = pl.pallas_call(
            kern,
            out_shape=jax.ShapeDtypeStruct((B, N, D), f32),
            grid=(B // Bb,),
            in_specs=[
                pl.BlockSpec((Bb, E, N * D), lambda i: (i, 0, 0)),    # hidden_state
                pl.BlockSpec((Bb, 1, H), lambda i: (i, 0, 0)),        # t_proj
                const_spec((N, H)),                                    # node_emb (f32)
                const_spec((N, H)),                                    # gpre = node@wga+bg
                const_spec((E, H)),                                    # wc (BN folded, bf16)
                const_spec((H, H)),                                    # wgb (bf16)
                const_spec((H, H)),                                    # w1a (bf16)
                const_spec((H, D)),                                    # w2 (bf16)
                const_spec((_NUM_VEC_ROWS, H)),                        # [bc, ln1_g, ln1_b]
                const_spec((1, D)),                                    # b2
            ],
            out_specs=pl.BlockSpec((Bb, N, D), lambda i: (i, 0, 0)),
            scratch_shapes=[pltpu.VMEM((N * D, H), f32),               # per-batch conv act
                            pltpu.VMEM((Bb * N, H), f32)],             # pooled means
            compiler_params=pltpu.CompilerParams(
                dimension_semantics=("parallel",),
                vmem_limit_bytes=vmem_limit),
        )(hs, tproj, p['node_emb'], gpre, wc_f, wgb.astype(bf16),
          w1a.astype(bf16), p['w2'].astype(bf16), vec, p['b2'])
    else:
        base = p['node_emb'] @ w1a                                    # [N, H] grid-invariant
        fixed = H * D * 2 + (N * H + _NUM_VEC_ROWS * H + D) * 4
        per_b = 2 * (H + N * D) * 4
        Bb = _pick_block_b(B, N, per_b, fixed)
        vmem_limit = _vmem_limit_bytes(fixed + Bb * per_b)

        kern = functools.partial(_nohs_kernel, Bb, N, D, H)
        out_bnd = pl.pallas_call(
            kern,
            out_shape=jax.ShapeDtypeStruct((B, N, D), f32),
            grid=(B // Bb,),
            in_specs=[
                pl.BlockSpec((Bb, 1, H), lambda i: (i, 0, 0)),        # t_proj
                const_spec((N, H)),                                    # node@w1a
                const_spec((H, D)),                                    # w2 (bf16)
                const_spec((_NUM_VEC_ROWS, H)),
                const_spec((1, D)),
            ],
            out_specs=pl.BlockSpec((Bb, N, D), lambda i: (i, 0, 0)),
            compiler_params=pltpu.CompilerParams(
                dimension_semantics=("parallel",),
                vmem_limit_bytes=vmem_limit),
        )(tproj, base, p['w2'].astype(bf16), vec, p['b2'])

    # horizon axis is a pure broadcast of the per-node result
    return jnp.broadcast_to(out_bnd[:, None], (B, T, N, D))


def spatio_temporal_output_head(params, cfg, text_features, hidden_state=None):
    # NOTE: the PyTorch module's host-side output cache (cache_key fast path)
    # has no device-side equivalent and is intentionally not reproduced.
    cfg_key = tuple(sorted(cfg.items()))
    return _run(params, text_features, hidden_state, cfg_key)


# --------------------------------------------------------------------------
# Pure-JAX reference (mirrors the PyTorch forward, eval mode) for validation.
# --------------------------------------------------------------------------
def reference_forward(params, cfg, text_features, hidden_state=None):
    p = params
    B = text_features.shape[0]
    N, T, D, H = cfg['num_nodes'], cfg['horizon'], cfg['output_dim'], cfg['hidden_dim']
    t = text_features @ p['wt'] + p['bt'][0]
    t = _gelu(_layernorm(t, p['lnt_g'][0], p['lnt_b'][0]))
    node = jnp.broadcast_to(p['node_emb'][None], (B, N, H))
    if hidden_state is not None:
        x = jnp.transpose(hidden_state, (0, 2, 3, 1))          # [B, N, D, E]
        h = x @ p['wc'] + p['bc'][0]
        h = h * p['bn_scale'][0] + p['bn_shift'][0]
        h = _gelu(h).mean(axis=2)                              # [B, N, H]
        comb = jnp.concatenate([node, h], axis=-1)
        gate = jax.nn.sigmoid(comb @ p['wg'] + p['bg'][0])
        node = gate * node + (1.0 - gate) * h
    comb = jnp.concatenate(
        [node, jnp.broadcast_to(t[:, None, :], node.shape)], axis=-1)
    y = comb @ p['w1'] + p['b1'][0]
    y = _gelu(_layernorm(y, p['ln1_g'][0], p['ln1_b'][0]))
    out = y @ p['w2'] + p['b2'][0]
    return jnp.broadcast_to(out[:, None], (B, T, N, D))


if __name__ == "__main__":
    key = jax.random.PRNGKey(0)
    B, H, E, N, D, T = 2, 32, 32, 16, 4, 8
    cfg = dict(horizon=T, num_nodes=N, output_dim=D, hidden_dim=H, embed_dim=E)

    params = init_params(key, cfg)
    k1, k2 = jax.random.split(jax.random.fold_in(key, 123))
    text = jax.random.normal(k1, (B, H), jnp.float32)
    hidden = jax.random.normal(k2, (B, E, N, D), jnp.float32)

    out = jax.block_until_ready(spatio_temporal_output_head(params, cfg, text, hidden))
    assert out.shape == (B, T, N, D), out.shape

    ref = reference_forward(params, cfg, text, hidden)
    err = float(jnp.max(jnp.abs(out - ref)))
    # bf16 MXU operands (f32 accumulate) -> allow a few % deviation vs the f32 reference
    assert jnp.allclose(out, ref, rtol=4e-2, atol=4e-2), err

    # path without hidden_state (fusion gate / conv skipped)
    out2 = jax.block_until_ready(spatio_temporal_output_head(params, cfg, text, None))
    ref2 = reference_forward(params, cfg, text, None)
    assert out2.shape == (B, T, N, D)
    assert jnp.allclose(out2, ref2, rtol=4e-2, atol=4e-2)

    print("KERNEL_OK")
</pallas_src>

<mosaic_0001>
module attributes {stable_mosaic.version = 11 : i64} {
  func.func @_fused_kernel(%arg0: i32, %arg1: memref<1x32x64xf32, #tpu.memory_space<vmem>>, %arg2: memref<1x1x32xf32, #tpu.memory_space<vmem>>, %arg3: memref<16x32xf32, #tpu.memory_space<vmem>>, %arg4: memref<16x32xf32, #tpu.memory_space<vmem>>, %arg5: memref<32x32xbf16, #tpu.memory_space<vmem>>, %arg6: memref<32x32xbf16, #tpu.memory_space<vmem>>, %arg7: memref<32x32xbf16, #tpu.memory_space<vmem>>, %arg8: memref<32x4xbf16, #tpu.memory_space<vmem>>, %arg9: memref<3x32xf32, #tpu.memory_space<vmem>>, %arg10: memref<1x4xf32, #tpu.memory_space<vmem>>, %arg11: memref<1x16x4xf32, #tpu.memory_space<vmem>>, %arg12: memref<64x32xf32, #tpu.memory_space<vmem>>, %arg13: memref<16x32xf32, #tpu.memory_space<vmem>>) attributes {dimension_semantics = [#tpu.dimension_semantics<parallel>], iteration_bounds = array<i64: 2>, scalar_prefetch = 0 : i64, scratch_operands = 2 : i64, tpu.core_type = #tpu.core_type<tc>, window_params = [{transform_indices = @transform_0, window_bounds = array<i64: 1, 32, 64>}, {transform_indices = @transform_1, window_bounds = array<i64: 1, 1, 32>}, {pipeline_mode = #tpu.pipeline_mode<synchronous>, transform_indices = @transform_2, window_bounds = array<i64: 16, 32>}, {pipeline_mode = #tpu.pipeline_mode<synchronous>, transform_indices = @transform_3, window_bounds = array<i64: 16, 32>}, {pipeline_mode = #tpu.pipeline_mode<synchronous>, transform_indices = @transform_4, window_bounds = array<i64: 32, 32>}, {pipeline_mode = #tpu.pipeline_mode<synchronous>, transform_indices = @transform_5, window_bounds = array<i64: 32, 32>}, {pipeline_mode = #tpu.pipeline_mode<synchronous>, transform_indices = @transform_6, window_bounds = array<i64: 32, 32>}, {pipeline_mode = #tpu.pipeline_mode<synchronous>, transform_indices = @transform_7, window_bounds = array<i64: 32, 4>}, {pipeline_mode = #tpu.pipeline_mode<synchronous>, transform_indices = @transform_8, window_bounds = array<i64: 3, 32>}, {pipeline_mode = #tpu.pipeline_mode<synchronous>, transform_indices = @transform_9, window_bounds = array<i64: 1, 4>}, {transform_indices = @transform_10, window_bounds = array<i64: 1, 16, 4>}]} {
    %c0 = arith.constant 0 : index
    %c0_0 = arith.constant 0 : index
    %0 = vector.load %arg9[%c0, %c0_0] : memref<3x32xf32, #tpu.memory_space<vmem>>, vector<1x32xf32>
    %c1 = arith.constant 1 : index
    %c0_1 = arith.constant 0 : index
    %1 = vector.load %arg9[%c1, %c0_1] : memref<3x32xf32, #tpu.memory_space<vmem>>, vector<1x32xf32>
    %c2 = arith.constant 2 : index
    %c0_2 = arith.constant 0 : index
    %2 = vector.load %arg9[%c2, %c0_2] : memref<3x32xf32, #tpu.memory_space<vmem>>, vector<1x32xf32>
    %c0_3 = arith.constant 0 : index
    %c0_4 = arith.constant 0 : index
    %c0_5 = arith.constant 0 : index
    %3 = vector.load %arg1[%c0_3, %c0_4, %c0_5] : memref<1x32x64xf32, #tpu.memory_space<vmem>>, vector<1x32x64xf32>
    %4 = vector.shape_cast %3 : vector<1x32x64xf32> to vector<32x64xf32>
    %5 = arith.truncf %4 : vector<32x64xf32> to vector<32x64xbf16>
    %c0_6 = arith.constant 0 : index
    %c0_7 = arith.constant 0 : index
    %6 = vector.load %arg5[%c0_6, %c0_7] : memref<32x32xbf16, #tpu.memory_space<vmem>>, vector<32x32xbf16>
    %cst = arith.constant dense<0.000000e+00> : vector<64x32xf32>
    %7 = tpu.matmul %5, %6, %cst {dimension_numbers = #tpu.dot_dimension_numbers<[0], [0], [1], [1], [0, 1, 1, 1], [], []>} : vector<32x64xbf16>, vector<32x32xbf16>, vector<64x32xf32> -> vector<64x32xf32>
    %8 = vector.broadcast %0 : vector<1x32xf32> to vector<64x32xf32>
    %9 = arith.addf %7, %8 : vector<64x32xf32>
    %cst_8 = arith.constant 5.000000e-01 : f32
    %10 = vector.broadcast %cst_8 : f32 to vector<64x32xf32>
    %11 = arith.mulf %10, %9 : vector<64x32xf32>
    %cst_9 = arith.constant 1.41421354 : f32
    %12 = vector.broadcast %cst_9 : f32 to vector<64x32xf32>
    %13 = arith.divf %9, %12 : vector<64x32xf32>
    %14 = math.erf %13 : vector<64x32xf32>
    %cst_10 = arith.constant 1.000000e+00 : f32
    %15 = vector.broadcast %cst_10 : f32 to vector<64x32xf32>
    %16 = arith.addf %15, %14 : vector<64x32xf32>
    %17 = arith.mulf %11, %16 : vector<64x32xf32>
    %c0_11 = arith.constant 0 : index
    %c0_12 = arith.constant 0 : index
    %18 = vector.load %arg12[%c0_11, %c0_12] : memref<64x32xf32, #tpu.memory_space<vmem>>, vector<64x32xf32>
    tpu.vector_store %arg12[%c0_11, %c0_12], %17 {strides = array<i32>} : memref<64x32xf32, #tpu.memory_space<vmem>>, vector<64x32xf32>,
    %c0_13 = arith.constant 0 : index
    %c0_14 = arith.constant 0 : index
    %19 = tpu.strided_load %arg12[%c0_13, %c0_14] {strides = array<i32: 4, 1>} : memref<64x32xf32, #tpu.memory_space<vmem>>, vector<16x32xf32>
    %c1_15 = arith.constant 1 : index
    %c0_16 = arith.constant 0 : index
    %20 = tpu.strided_load %arg12[%c1_15, %c0_16] {strides = array<i32: 4, 1>} : memref<64x32xf32, #tpu.memory_space<vmem>>, vector<16x32xf32>
    %21 = arith.addf %19, %20 : vector<16x32xf32>
    %c2_17 = arith.constant 2 : index
    %c0_18 = arith.constant 0 : index
    %22 = tpu.strided_load %arg12[%c2_17, %c0_18] {strides = array<i32: 4, 1>} : memref<64x32xf32, #tpu.memory_space<vmem>>, vector<16x32xf32>
    %23 = arith.addf %21, %22 : vector<16x32xf32>
    %c3 = arith.constant 3 : index
    %c0_19 = arith.constant 0 : index
    %24 = tpu.strided_load %arg12[%c3, %c0_19] {strides = array<i32: 4, 1>} : memref<64x32xf32, #tpu.memory_space<vmem>>, vector<16x32xf32>
    %25 = arith.addf %23, %24 : vector<16x32xf32>
    %cst_20 = arith.constant 2.500000e-01 : f32
    %26 = vector.broadcast %cst_20 : f32 to vector<16x32xf32>
    %27 = arith.mulf %25, %26 : vector<16x32xf32>
    %c0_21 = arith.constant 0 : index
    %c0_22 = arith.constant 0 : index
    %28 = vector.load %arg13[%c0_21, %c0_22] : memref<16x32xf32, #tpu.memory_space<vmem>>, vector<16x32xf32>
    tpu.vector_store %arg13[%c0_21, %c0_22], %27 {strides = array<i32>} : memref<16x32xf32, #tpu.memory_space<vmem>>, vector<16x32xf32>,
    %c0_23 = arith.constant 0 : index
    %c0_24 = arith.constant 0 : index
    %29 = vector.load %arg13[%c0_23, %c0_24] : memref<16x32xf32, #tpu.memory_space<vmem>>, vector<16x32xf32>
    %c0_25 = arith.constant 0 : index
    %c0_26 = arith.constant 0 : index
    %30 = vector.load %arg3[%c0_25, %c0_26] : memref<16x32xf32, #tpu.memory_space<vmem>>, vector<16x32xf32>
    %c0_27 = arith.constant 0 : index
    %c0_28 = arith.constant 0 : index
    %31 = vector.load %arg4[%c0_27, %c0_28] : memref<16x32xf32, #tpu.memory_space<vmem>>, vector<16x32xf32>
    %32 = arith.truncf %29 : vector<16x32xf32> to vector<16x32xbf16>
    %c0_29 = arith.constant 0 : index
    %c0_30 = arith.constant 0 : index
    %33 = vector.load %arg6[%c0_29, %c0_30] : memref<32x32xbf16, #tpu.memory_space<vmem>>, vector<32x32xbf16>
    %cst_31 = arith.constant dense<0.000000e+00> : vector<16x32xf32>
    %34 = tpu.matmul %32, %33, %cst_31 {dimension_numbers = #tpu.dot_dimension_numbers<[1], [0], [0], [1], [0, 0, 1, 1], [], []>} : vector<16x32xbf16>, vector<32x32xbf16>, vector<16x32xf32> -> vector<16x32xf32>
    %35 = arith.addf %31, %34 : vector<16x32xf32>
    %36 = arith.negf %35 : vector<16x32xf32>
    %37 = math.exp %36 : vector<16x32xf32>
    %cst_32 = arith.constant 1.000000e+00 : f32
    %38 = vector.broadcast %cst_32 : f32 to vector<16x32xf32>
    %39 = arith.addf %38, %37 : vector<16x32xf32>
    %40 = arith.divf %38, %39 : vector<16x32xf32>
    %41 = arith.mulf %40, %30 : vector<16x32xf32>
    %cst_33 = arith.constant 1.000000e+00 : f32
    %42 = vector.broadcast %cst_33 : f32 to vector<16x32xf32>
    %43 = arith.subf %42, %40 : vector<16x32xf32>
    %44 = arith.mulf %43, %29 : vector<16x32xf32>
    %45 = arith.addf %41, %44 : vector<16x32xf32>
    %46 = arith.truncf %45 : vector<16x32xf32> to vector<16x32xbf16>
    %c0_34 = arith.constant 0 : index
    %c0_35 = arith.constant 0 : index
    %47 = vector.load %arg7[%c0_34, %c0_35] : memref<32x32xbf16, #tpu.memory_space<vmem>>, vector<32x32xbf16>
    %cst_36 = arith.constant dense<0.000000e+00> : vector<16x32xf32>
    %48 = tpu.matmul %46, %47, %cst_36 {dimension_numbers = #tpu.dot_dimension_numbers<[1], [0], [0], [1], [0, 0, 1, 1], [], []>} : vector<16x32xbf16>, vector<32x32xbf16>, vector<16x32xf32> -> vector<16x32xf32>
    %c0_37 = arith.constant 0 : index
    %c0_38 = arith.constant 0 : index
    %c0_39 = arith.constant 0 : index
    %49 = vector.load %arg2[%c0_37, %c0_38, %c0_39] : memref<1x1x32xf32, #tpu.memory_space<vmem>>, vector<1x1x32xf32>
    %50 = vector.shape_cast %49 : vector<1x1x32xf32> to vector<1x32xf32>
    %51 = vector.shape_cast %50 : vector<1x32xf32> to vector<1x32xf32>
    %52 = vector.broadcast %51 : vector<1x32xf32> to vector<16x32xf32>
    %53 = arith.addf %48, %52 : vector<16x32xf32>
    %cst_40 = arith.constant dense<0.000000e+00> : vector<16xf32>
    %54 = vector.multi_reduction <add>, %53, %cst_40 [1] : vector<16x32xf32> to vector<16xf32>
    %55 = vector.shape_cast %54 : vector<16xf32> to vector<16x1xf32>
    %cst_41 = arith.constant 3.200000e+01 : f32
    %56 = vector.broadcast %cst_41 : f32 to vector<16x1xf32>
    %57 = arith.divf %55, %56 : vector<16x1xf32>
    %58 = vector.broadcast %57 : vector<16x1xf32> to vector<16x32xf32>
    %59 = arith.subf %53, %58 : vector<16x32xf32>
    %60 = arith.mulf %59, %59 : vector<16x32xf32>
    %cst_42 = arith.constant dense<0.000000e+00> : vector<16xf32>
    %61 = vector.multi_reduction <add>, %60, %cst_42 [1] : vector<16x32xf32> to vector<16xf32>
    %62 = vector.shape_cast %61 : vector<16xf32> to vector<16x1xf32>
    %cst_43 = arith.constant 3.200000e+01 : f32
    %63 = vector.broadcast %cst_43 : f32 to vector<16x1xf32>
    %64 = arith.divf %62, %63 : vector<16x1xf32>
    %65 = vector.broadcast %57 : vector<16x1xf32> to vector<16x32xf32>
    %66 = arith.subf %53, %65 : vector<16x32xf32>
    %cst_44 = arith.constant 9.99999974E-6 : f32
    %67 = vector.broadcast %cst_44 : f32 to vector<16x1xf32>
    %68 = arith.addf %64, %67 : vector<16x1xf32>
    %69 = math.rsqrt %68 : vector<16x1xf32>
    %70 = vector.broadcast %69 : vector<16x1xf32> to vector<16x32xf32>
    %71 = arith.mulf %66, %70 : vector<16x32xf32>
    %72 = vector.broadcast %1 : vector<1x32xf32> to vector<16x32xf32>
    %73 = arith.mulf %71, %72 : vector<16x32xf32>
    %74 = vector.broadcast %2 : vector<1x32xf32> to vector<16x32xf32>
    %75 = arith.addf %73, %74 : vector<16x32xf32>
    %cst_45 = arith.constant 5.000000e-01 : f32
    %76 = vector.broadcast %cst_45 : f32 to vector<16x32xf32>
    %77 = arith.mulf %76, %75 : vector<16x32xf32>
    %cst_46 = arith.constant 1.41421354 : f32
    %78 = vector.broadcast %cst_46 : f32 to vector<16x32xf32>
    %79 = arith.divf %75, %78 : vector<16x32xf32>
    %80 = math.erf %79 : vector<16x32xf32>
    %cst_47 = arith.constant 1.000000e+00 : f32
    %81 = vector.broadcast %cst_47 : f32 to vector<16x32xf32>
    %82 = arith.addf %81, %80 : vector<16x32xf32>
    %83 = arith.mulf %77, %82 : vector<16x32xf32>
    %84 = arith.truncf %83 : vector<16x32xf32> to vector<16x32xbf16>
    %c0_48 = arith.constant 0 : index
    %c0_49 = arith.constant 0 : index
    %85 = vector.load %arg8[%c0_48, %c0_49] : memref<32x4xbf16, #tpu.memory_space<vmem>>, vector<32x4xbf16>
    %cst_50 = arith.constant dense<0.000000e+00> : vector<16x4xf32>
    %86 = tpu.matmul %84, %85, %cst_50 {dimension_numbers = #tpu.dot_dimension_numbers<[1], [0], [0], [1], [0, 0, 1, 1], [], []>} : vector<16x32xbf16>, vector<32x4xbf16>, vector<16x4xf32> -> vector<16x4xf32>
    %c0_51 = arith.constant 0 : index
    %c0_52 = arith.constant 0 : index
    %87 = vector.load %arg10[%c0_51, %c0_52] : memref<1x4xf32, #tpu.memory_space<vmem>>, vector<1x4xf32>
    %88 = vector.broadcast %87 : vector<1x4xf32> to vector<16x4xf32>
    %89 = arith.addf %86, %88 : vector<16x4xf32>
    %c0_53 = arith.constant 0 : index
    %c0_54 = arith.constant 0 : index
    %c0_55 = arith.constant 0 : index
    %90 = vector.load %arg11[%c0_53, %c0_54, %c0_55] : memref<1x16x4xf32, #tpu.memory_space<vmem>>, vector<1x16x4xf32>
    %91 = vector.shape_cast %90 : vector<1x16x4xf32> to vector<16x4xf32>
    %92 = vector.shape_cast %89 : vector<16x4xf32> to vector<1x16x4xf32>
    tpu.vector_store %arg11[%c0_53, %c0_54, %c0_55], %92 {strides = array<i32>} : memref<1x16x4xf32, #tpu.memory_space<vmem>>, vector<1x16x4xf32>,
    return
  }
  func.func @transform_0(%arg0: i32) -> (i32, i32, i32) {
    %c0_i32 = arith.constant 0 : i32
    %c0_i32_0 = arith.constant 0 : i32
    %c0_i32_1 = arith.constant 0 : i32
    return %arg0, %c0_i32, %c0_i32_0 : i32, i32, i32
  }
  func.func @transform_1(%arg0: i32) -> (i32, i32, i32) {
    %c0_i32 = arith.constant 0 : i32
    %c0_i32_0 = arith.constant 0 : i32
    %c0_i32_1 = arith.constant 0 : i32
    return %arg0, %c0_i32, %c0_i32_0 : i32, i32, i32
  }
  func.func @transform_2(%arg0: i32) -> (i32, i32) {
    %c0_i32 = arith.constant 0 : i32
    %c0_i32_0 = arith.constant 0 : i32
    %c0_i32_1 = arith.constant 0 : i32
    return %c0_i32, %c0_i32_0 : i32, i32
  }
  func.func @transform_3(%arg0: i32) -> (i32, i32) {
    %c0_i32 = arith.constant 0 : i32
    %c0_i32_0 = arith.constant 0 : i32
    %c0_i32_1 = arith.constant 0 : i32
    return %c0_i32, %c0_i32_0 : i32, i32
  }
  func.func @transform_4(%arg0: i32) -> (i32, i32) {
    %c0_i32 = arith.constant 0 : i32
    %c0_i32_0 = arith.constant 0 : i32
    %c0_i32_1 = arith.constant 0 : i32
    return %c0_i32, %c0_i32_0 : i32, i32
  }
  func.func @transform_5(%arg0: i32) -> (i32, i32) {
    %c0_i32 = arith.constant 0 : i32
    %c0_i32_0 = arith.constant 0 : i32
    %c0_i32_1 = arith.constant 0 : i32
    return %c0_i32, %c0_i32_0 : i32, i32
  }
  func.func @transform_6(%arg0: i32) -> (i32, i32) {
    %c0_i32 = arith.constant 0 : i32
    %c0_i32_0 = arith.constant 0 : i32
    %c0_i32_1 = arith.constant 0 : i32
    return %c0_i32, %c0_i32_0 : i32, i32
  }
  func.func @transform_7(%arg0: i32) -> (i32, i32) {
    %c0_i32 = arith.constant 0 : i32
    %c0_i32_0 = arith.constant 0 : i32
    %c0_i32_1 = arith.constant 0 : i32
    return %c0_i32, %c0_i32_0 : i32, i32
  }
  func.func @transform_8(%arg0: i32) -> (i32, i32) {
    %c0_i32 = arith.constant 0 : i32
    %c0_i32_0 = arith.constant 0 : i32
    %c0_i32_1 = arith.constant 0 : i32
    return %c0_i32, %c0_i32_0 : i32, i32
  }
  func.func @transform_9(%arg0: i32) -> (i32, i32) {
    %c0_i32 = arith.constant 0 : i32
    %c0_i32_0 = arith.constant 0 : i32
    %c0_i32_1 = arith.constant 0 : i32
    return %c0_i32, %c0_i32_0 : i32, i32
  }
  func.func @transform_10(%arg0: i32) -> (i32, i32, i32) {
    %c0_i32 = arith.constant 0 : i32
    %c0_i32_0 = arith.constant 0 : i32
    %c0_i32_1 = arith.constant 0 : i32
    return %arg0, %c0_i32, %c0_i32_0 : i32, i32, i32
  }
}

</mosaic_0001>

<llo_original>
// kernel: _run.1
$region0: #{_run.1}
  #allocation0 [shape = 'u32[]', space=smem, size = 0x4, offset = 0x4, fixed_abs, tag = 'smem constant byte address 0x4 - core index']
  #allocation1 [shape = 'u32[144,128]{1,0:T(1,128)}', space=vmem, size = 0x12000, scoped, tag = 'internal scratch']
  #allocation2 [shape = 'f32[64,32]{1,0:T(8,128)}', space=vmem, size = 0x8000, scoped, tag = 'scratch operand']
  #allocation3 [shape = 'f32[16,32]{1,0:T(8,128)}', space=vmem, size = 0x2000, scoped, tag = 'scratch operand']
  %s0 = inlined_call_operand.vmem [shape: f32[2,32,64], index: 0, kind: input, shape index: {}]
  %s1 = inlined_call_operand.vmem [shape: f32[2,1,32], index: 1, kind: input, shape index: {}]
  %s2 = inlined_call_operand.vmem [shape: f32[16,32], index: 2, kind: input, shape index: {}]
  %s3 = inlined_call_operand.vmem [shape: f32[16,32], index: 3, kind: input, shape index: {}]
  %s4 = inlined_call_operand.vmem [shape: bf16[32,32], index: 4, kind: input, shape index: {}]
  %s5 = inlined_call_operand.vmem [shape: bf16[32,32], index: 5, kind: input, shape index: {}]
  %s6 = inlined_call_operand.vmem [shape: bf16[32,32], index: 6, kind: input, shape index: {}]
  %s7 = inlined_call_operand.vmem [shape: bf16[32,4], index: 7, kind: input, shape index: {}]
  %s8 = inlined_call_operand.vmem [shape: f32[3,32], index: 8, kind: input, shape index: {}]
  %s9 = inlined_call_operand.vmem [shape: f32[1,4], index: 9, kind: input, shape index: {}]
  %s10 = inlined_call_operand.vmem [shape: f32[2,16,4], index: 10, kind: output, shape index: {}]
  %s11 = sld [smem:[#allocation0]]
  $region73: #{_run.1} parent=0
    _
  %s13 = ssub.s32 1, %s11
  %s14 = scalar_select 0, %s13, %s11
  loop: start=0, step=1, limit=4
  $region2: #{_run.1} parent=0 // loop_pre_header
    _
  $region3: #{_run.1} parent=0 // loop_header
    %s16 = sphi 0, %s20
    %p17 = scmp.ge.s32.totalorder %s16, 4
    %s26 = sphi 0, %s28
    %s29 = sphi 0, %s26
    %s30 = sphi 0, %s29
    %s46 = sphi 0, %s30
    %s52 = sphi 0, %s54
    %s55 = sphi 0, %s52
    %s56 = sphi 0, %s55
    %s72 = sphi 0, %s56
    %s76 = sphi 0, %s76
    %s78 = sphi 0, %s76
    %s79 = sphi 0, %s78
    %s93 = sphi 0, %s79
    %s97 = sphi 0, %s97
    %s99 = sphi 0, %s97
    %s100 = sphi 0, %s99
    %s114 = sphi 0, %s100
    %s118 = sphi 0, %s118
    %s120 = sphi 0, %s118
    %s121 = sphi 0, %s120
    %s135 = sphi 0, %s121
    %s139 = sphi 0, %s139
    %s141 = sphi 0, %s139
    %s142 = sphi 0, %s141
    %s156 = sphi 0, %s142
    %s160 = sphi 0, %s160
    %s162 = sphi 0, %s160
    %s163 = sphi 0, %s162
    %s177 = sphi 0, %s163
    %s181 = sphi 0, %s181
    %s183 = sphi 0, %s181
    %s184 = sphi 0, %s183
    %s198 = sphi 0, %s184
    %s202 = sphi 0, %s202
    %s204 = sphi 0, %s202
    %s205 = sphi 0, %s204
    %s219 = sphi 0, %s205
    %s223 = sphi 0, %s223
    %s225 = sphi 0, %s223
    %s226 = sphi 0, %s225
    %s240 = sphi 0, %s226
    %s246 = sphi 0, %s248
    %s249 = sphi 0, %s246
    %s250 = sphi 0, %s249
    %s266 = sphi 0, %s250
  $region4: #{_run.1} parent=0 // loop_header_branch
    %19 = sbr.rel (%p17) target = $region8
  $region5: #{_run.1} parent=0 // loop_body
    %s21 = ssub.s32 %s16, 1
    %s22 = ssub.s32 %s16, 2
    %s23 = sadd.s32 %s16, 1
    %s24 = ssub.s32 %s16, %s23
    %p25 = scmp.eq.s32.totalorder %s24, 0
    %s27 = sadd.s32 %s26, 1
    %s28 = scalar_select %p25, %s26, %s27
    %p31 = pneg %p25
    %p32 = scmp.eq.s32.totalorder %s16, 1
    %p33 = por %p31, %p32
    %p34 = scmp.ne.s32.totalorder %s26, %s29
    %p35 = scmp.eq.s32.totalorder %s16, 0
    %p36 = por %p34, %p35
    %p37 = scmp.ne.s32.totalorder %s26, %s29
    %p38 = scmp.eq.s32.totalorder %s21, 1
    %p39 = por %p37, %p38
    %p40 = scmp.ne.s32.totalorder %s29, %s30
    %p41 = scmp.eq.s32.totalorder %s21, 0
    %p42 = por %p40, %p41
    %p43 = scmp.ne.s32.totalorder %s29, %s30
    %p44 = scmp.eq.s32.totalorder %s22, 1
    %p45 = por %p43, %p44
    %p47 = scmp.ne.s32.totalorder %s30, %s46
    %p48 = scmp.eq.s32.totalorder %s22, 0
    %p49 = por %p47, %p48
    %s50 = ssub.s32 %s16, %s23
    %p51 = scmp.eq.s32.totalorder %s50, 0
    %s53 = sadd.s32 %s52, 1
    %s54 = scalar_select %p51, %s52, %s53
    %p57 = pneg %p51
    %p58 = scmp.eq.s32.totalorder %s16, 1
    %p59 = por %p57, %p58
    %p60 = scmp.ne.s32.totalorder %s52, %s55
    %p61 = scmp.eq.s32.totalorder %s16, 0
    %p62 = por %p60, %p61
    %p63 = scmp.ne.s32.totalorder %s52, %s55
    %p64 = scmp.eq.s32.totalorder %s21, 1
    %p65 = por %p63, %p64
    %p66 = scmp.ne.s32.totalorder %s55, %s56
    %p67 = scmp.eq.s32.totalorder %s21, 0
    %p68 = por %p66, %p67
    %p69 = scmp.ne.s32.totalorder %s55, %s56
    %p70 = scmp.eq.s32.totalorder %s22, 1
    %p71 = por %p69, %p70
    %p73 = scmp.ne.s32.totalorder %s56, %s72
    %p74 = scmp.eq.s32.totalorder %s22, 0
    %p75 = por %p73, %p74
    %s77 = sadd.s32 %s76, 1
    %p80 = scmp.eq.s32.totalorder %s16, 1
    %p81 = scmp.ne.s32.totalorder %s76, %s78
    %p82 = scmp.eq.s32.totalorder %s16, 0
    %p83 = por %p81, %p82
    %p84 = scmp.ne.s32.totalorder %s76, %s78
    %p85 = scmp.eq.s32.totalorder %s21, 1
    %p86 = por %p84, %p85
    %p87 = scmp.ne.s32.totalorder %s78, %s79
    %p88 = scmp.eq.s32.totalorder %s21, 0
    %p89 = por %p87, %p88
    %p90 = scmp.ne.s32.totalorder %s78, %s79
    %p91 = scmp.eq.s32.totalorder %s22, 1
    %p92 = por %p90, %p91
    %p94 = scmp.ne.s32.totalorder %s79, %s93
    %p95 = scmp.eq.s32.totalorder %s22, 0
    %p96 = por %p94, %p95
    %s98 = sadd.s32 %s97, 1
    %p101 = scmp.eq.s32.totalorder %s16, 1
    %p102 = scmp.ne.s32.totalorder %s97, %s99
    %p103 = scmp.eq.s32.totalorder %s16, 0
    %p104 = por %p102, %p103
    %p105 = scmp.ne.s32.totalorder %s97, %s99
    %p106 = scmp.eq.s32.totalorder %s21, 1
    %p107 = por %p105, %p106
    %p108 = scmp.ne.s32.totalorder %s99, %s100
    %p109 = scmp.eq.s32.totalorder %s21, 0
    %p110 = por %p108, %p109
    %p111 = scmp.ne.s32.totalorder %s99, %s100
    %p112 = scmp.eq.s32.totalorder %s22, 1
    %p113 = por %p111, %p112
    %p115 = scmp.ne.s32.totalorder %s100, %s114
    %p116 = scmp.eq.s32.totalorder %s22, 0
    %p117 = por %p115, %p116
    %s119 = sadd.s32 %s118, 1
    %p122 = scmp.eq.s32.totalorder %s16, 1
    %p123 = scmp.ne.s32.totalorder %s118, %s120
    %p124 = scmp.eq.s32.totalorder %s16, 0
    %p125 = por %p123, %p124
    %p126 = scmp.ne.s32.totalorder %s118, %s120
    %p127 = scmp.eq.s32.totalorder %s21, 1
    %p128 = por %p126, %p127
    %p129 = scmp.ne.s32.totalorder %s120, %s121
    %p130 = scmp.eq.s32.totalorder %s21, 0
    %p131 = por %p129, %p130
    %p132 = scmp.ne.s32.totalorder %s120, %s121
    %p133 = scmp.eq.s32.totalorder %s22, 1
    %p134 = por %p132, %p133
    %p136 = scmp.ne.s32.totalorder %s121, %s135
    %p137 = scmp.eq.s32.totalorder %s22, 0
    %p138 = por %p136, %p137
    %s140 = sadd.s32 %s139, 1
    %p143 = scmp.eq.s32.totalorder %s16, 1
    %p144 = scmp.ne.s32.totalorder %s139, %s141
    %p145 = scmp.eq.s32.totalorder %s16, 0
    %p146 = por %p144, %p145
    %p147 = scmp.ne.s32.totalorder %s139, %s141
    %p148 = scmp.eq.s32.totalorder %s21, 1
    %p149 = por %p147, %p148
    %p150 = scmp.ne.s32.totalorder %s141, %s142
    %p151 = scmp.eq.s32.totalorder %s21, 0
    %p152 = por %p150, %p151
    %p153 = scmp.ne.s32.totalorder %s141, %s142
    %p154 = scmp.eq.s32.totalorder %s22, 1
    %p155 = por %p153, %p154
    %p157 = scmp.ne.s32.totalorder %s142, %s156
    %p158 = scmp.eq.s32.totalorder %s22, 0
    %p159 = por %p157, %p158
    %s161 = sadd.s32 %s160, 1
    %p164 = scmp.eq.s32.totalorder %s16, 1
    %p165 = scmp.ne.s32.totalorder %s160, %s162
    %p166 = scmp.eq.s32.totalorder %s16, 0
    %p167 = por %p165, %p166
    %p168 = scmp.ne.s32.totalorder %s160, %s162
    %p169 = scmp.eq.s32.totalorder %s21, 1
    %p170 = por %p168, %p169
    %p171 = scmp.ne.s32.totalorder %s162, %s163
    %p172 = scmp.eq.s32.totalorder %s21, 0
    %p173 = por %p171, %p172
    %p174 = scmp.ne.s32.totalorder %s162, %s163
    %p175 = scmp.eq.s32.totalorder %s22, 1
    %p176 = por %p174, %p175
    %p178 = scmp.ne.s32.totalorder %s163, %s177
    %p179 = scmp.eq.s32.totalorder %s22, 0
    %p180 = por %p178, %p179
    %s182 = sadd.s32 %s181, 1
    %p185 = scmp.eq.s32.totalorder %s16, 1
    %p186 = scmp.ne.s32.totalorder %s181, %s183
    %p187 = scmp.eq.s32.totalorder %s16, 0
    %p188 = por %p186, %p187
    %p189 = scmp.ne.s32.totalorder %s181, %s183
    %p190 = scmp.eq.s32.totalorder %s21, 1
    %p191 = por %p189, %p190
    %p192 = scmp.ne.s32.totalorder %s183, %s184
    %p193 = scmp.eq.s32.totalorder %s21, 0
    %p194 = por %p192, %p193
    %p195 = scmp.ne.s32.totalorder %s183, %s184
    %p196 = scmp.eq.s32.totalorder %s22, 1
    %p197 = por %p195, %p196
    %p199 = scmp.ne.s32.totalorder %s184, %s198
    %p200 = scmp.eq.s32.totalorder %s22, 0
    %p201 = por %p199, %p200
    %s203 = sadd.s32 %s202, 1
    %p206 = scmp.eq.s32.totalorder %s16, 1
    %p207 = scmp.ne.s32.totalorder %s202, %s204
    %p208 = scmp.eq.s32.totalorder %s16, 0
    %p209 = por %p207, %p208
    %p210 = scmp.ne.s32.totalorder %s202, %s204
    %p211 = scmp.eq.s32.totalorder %s21, 1
    %p212 = por %p210, %p211
    %p213 = scmp.ne.s32.totalorder %s204, %s205
    %p214 = scmp.eq.s32.totalorder %s21, 0
    %p215 = por %p213, %p214
    %p216 = scmp.ne.s32.totalorder %s204, %s205
    %p217 = scmp.eq.s32.totalorder %s22, 1
    %p218 = por %p216, %p217
    %p220 = scmp.ne.s32.totalorder %s205, %s219
    %p221 = scmp.eq.s32.totalorder %s22, 0
    %p222 = por %p220, %p221
    %s224 = sadd.s32 %s223, 1
    %p227 = scmp.eq.s32.totalorder %s16, 1
    %p228 = scmp.ne.s32.totalorder %s223, %s225
    %p229 = scmp.eq.s32.totalorder %s16, 0
    %p230 = por %p228, %p229
    %p231 = scmp.ne.s32.totalorder %s223, %s225
    %p232 = scmp.eq.s32.totalorder %s21, 1
    %p233 = por %p231, %p232
    %p234 = scmp.ne.s32.totalorder %s225, %s226
    %p235 = scmp.eq.s32.totalorder %s21, 0
    %p236 = por %p234, %p235
    %p237 = scmp.ne.s32.totalorder %s225, %s226
    %p238 = scmp.eq.s32.totalorder %s22, 1
    %p239 = por %p237, %p238
    %p241 = scmp.ne.s32.totalorder %s226, %s240
    %p242 = scmp.eq.s32.totalorder %s22, 0
    %p243 = por %p241, %p242
    %s244 = ssub.s32 %s16, %s23
    %p245 = scmp.eq.s32.totalorder %s244, 0
    %s247 = sadd.s32 %s246, 1
    %s248 = scalar_select %p245, %s246, %s247
    %p251 = pneg %p245
    %p252 = scmp.eq.s32.totalorder %s16, 1
    %p253 = por %p251, %p252
    %p254 = scmp.ne.s32.totalorder %s246, %s249
    %p255 = scmp.eq.s32.totalorder %s16, 0
    %p256 = por %p254, %p255
    %p257 = scmp.ne.s32.totalorder %s246, %s249
    %p258 = scmp.eq.s32.totalorder %s21, 1
    %p259 = por %p257, %p258
    %p260 = scmp.ne.s32.totalorder %s249, %s250
    %p261 = scmp.eq.s32.totalorder %s21, 0
    %p262 = por %p260, %p261
    %p263 = scmp.ne.s32.totalorder %s249, %s250
    %p264 = scmp.eq.s32.totalorder %s22, 1
    %p265 = por %p263, %p264
    %p267 = scmp.ne.s32.totalorder %s250, %s266
    %p268 = scmp.eq.s32.totalorder %s22, 0
    %p269 = por %p267, %p268
    %p270 = scmp.le.s32.totalorder 1, %s16
    %p271 = scmp.lt.s32.totalorder %s16, 3
    %p272 = pnand %p270, %p271
    %p273 = pneg %p272
    // Predicated region
    $region9: #{_run.1} parent=5 // pred_check
      _
    $region10: #{_run.1} parent=5 // pred_check_branch
      %275 = sbr.rel (%p272) target = $region12
    $region11: #{_run.1} parent=5 // pred_region
      %s276 = ssub.s32 %s16, 1
      // Predicated region
      $region13: #{_run.1} parent=11 // pred_check
        %p277 = pneg %p89
      $region14: #{_run.1} parent=11 // pred_check_branch
        %279 = sbr.rel (%p277) target = $region16
      $region15: #{_run.1} parent=11 // pred_region
        _
      $region16: #{_run.1} parent=11 // pred_fallthru
        _
      // Predicated region
      $region17: #{_run.1} parent=11 // pred_check
        %p280 = pneg %p110
      $region18: #{_run.1} parent=11 // pred_check_branch
        %282 = sbr.rel (%p280) target = $region20
      $region19: #{_run.1} parent=11 // pred_region
        _
      $region20: #{_run.1} parent=11 // pred_fallthru
        _
      // Predicated region
      $region21: #{_run.1} parent=11 // pred_check
        %p283 = pneg %p131
      $region22: #{_run.1} parent=11 // pred_check_branch
        %285 = sbr.rel (%p283) target = $region24
      $region23: #{_run.1} parent=11 // pred_region
        _
      $region24: #{_run.1} parent=11 // pred_fallthru
        _
      // Predicated region
      $region25: #{_run.1} parent=11 // pred_check
        %p286 = pneg %p152
      $region26: #{_run.1} parent=11 // pred_check_branch
        %288 = sbr.rel (%p286) target = $region28
      $region27: #{_run.1} parent=11 // pred_region
        _
      $region28: #{_run.1} parent=11 // pred_fallthru
        _
      // Predicated region
      $region29: #{_run.1} parent=11 // pred_check
        %p289 = pneg %p173
      $region30: #{_run.1} parent=11 // pred_check_branch
        %291 = sbr.rel (%p289) target = $region32
      $region31: #{_run.1} parent=11 // pred_region
        _
      $region32: #{_run.1} parent=11 // pred_fallthru
        _
      // Predicated region
      $region33: #{_run.1} parent=11 // pred_check
        %p292 = pneg %p194
      $region34: #{_run.1} parent=11 // pred_check_branch
        %294 = sbr.rel (%p292) target = $region36
      $region35: #{_run.1} parent=11 // pred_region
        _
      $region36: #{_run.1} parent=11 // pred_fallthru
        _
      // Predicated region
      $region37: #{_run.1} parent=11 // pred_check
        %p295 = pneg %p215
      $region38: #{_run.1} parent=11 // pred_check_branch
        %297 = sbr.rel (%p295) target = $region40
      $region39: #{_run.1} parent=11 // pred_region
        _
      $region40: #{_run.1} parent=11 // pred_fallthru
        _
      // Predicated region
      $region41: #{_run.1} parent=11 // pred_check
        %p298 = pneg %p236
      $region42: #{_run.1} parent=11 // pred_check_branch
        %300 = sbr.rel (%p298) target = $region44
      $region43: #{_run.1} parent=11 // pred_region
        _
      $region44: #{_run.1} parent=11 // pred_fallthru
        _
    $region12: #{_run.1} parent=5 // pred_fallthru
      _
    %p301 = scmp.lt.s32.totalorder %s16, 2
    // Predicated region
    $region45: #{_run.1} parent=5 // pred_check
      %p302 = pneg %p301
    $region46: #{_run.1} parent=5 // pred_check_branch
      %304 = sbr.rel (%p302) target = $region48
    $region47: #{_run.1} parent=5 // pred_region
      // Predicated region
      $region49: #{_run.1} parent=47 // pred_check
        %p305 = pneg %p36
      $region50: #{_run.1} parent=47 // pred_check_branch
        %307 = sbr.rel (%p305) target = $region52
      $region51: #{_run.1} parent=47 // pred_region
        %p308 = scmp.lt.s32.totalorder %s16, 1
        %s309 = scalar_select %p308, %s16, 1
        %s310 = smul.addr %s309, 4
        %s311 = smul.addr %s310, 8
        %s312 = scalar_lea.vmem %s0, %s311
      $region52: #{_run.1} parent=47 // pred_fallthru
        _
      // Predicated region
      $region53: #{_run.1} parent=47 // pred_check
        %p313 = pneg %p62
      $region54: #{_run.1} parent=47 // pred_check_branch
        %315 = sbr.rel (%p313) target = $region56
      $region55: #{_run.1} parent=47 // pred_region
        %p316 = scmp.lt.s32.totalorder %s16, 1
        %s317 = scalar_select %p316, %s16, 1
        %s318 = scalar_lea.vmem %s1, %s317
      $region56: #{_run.1} parent=47 // pred_fallthru
        _
    $region48: #{_run.1} parent=5 // pred_fallthru
      _
    %p319 = scmp.le.s32.totalorder 1, %s16
    %p320 = scmp.lt.s32.totalorder %s16, 3
    %p321 = pnand %p319, %p320
    %p322 = pneg %p321
    // Predicated region
    $region57: #{_run.1} parent=5 // pred_check
      _
    $region58: #{_run.1} parent=5 // pred_check_branch
      %324 = sbr.rel (%p321) target = $region60
    $region59: #{_run.1} parent=5 // pred_region
      %s325 = ssub.s32 %s16, 1
      %p326 = scmp.lt.s32.totalorder %s21, 1
      %s327 = scalar_select %p326, %s21, 1
      %s328 = smul.addr %s327, 4
      %s329 = smul.addr %s328, 8
      %s330 = scalar_lea.vmem %s0, %s329
      %p331 = pneg %p42
      %p332 = pneg %p39
      %p333 = scmp.lt.s32.totalorder %s21, 1
      %s334 = scalar_select %p333, %s21, 1
      %s335 = scalar_lea.vmem %s1, %s334
      %p336 = pneg %p68
      %p337 = pneg %p65
      %p338 = pneg %p89
      %p339 = pneg %p86
      %p340 = pneg %p110
      %p341 = pneg %p107
      %p342 = pneg %p131
      %p343 = pneg %p128
      %p344 = pneg %p152
      %p345 = pneg %p149
      %p346 = pneg %p173
      %p347 = pneg %p170
      %p348 = pneg %p194
      %p349 = pneg %p191
      %p350 = pneg %p215
      %p351 = pneg %p212
      %p352 = pneg %p236
      %p353 = pneg %p233
      %p354 = pneg %p262
      %p355 = pneg %p259
      %p356 = scmp.lt.s32.totalorder %s21, 1
      %s357 = scalar_select %p356, %s21, 1
      %s358 = smul.addr %s357, 2
      %s359 = smul.addr %s358, 8
      %s360 = scalar_lea.vmem %s10, %s359
      %p361 = scmp.lt.s32.totalorder %s21, 1
      %s362 = scalar_select %p361, %s21, 1
      %s363 = smul.addr %s362, 4
      %s364 = smul.addr %s363, 8
      %s365 = scalar_lea.vmem %s0, %s364
      %p366 = scmp.lt.s32.totalorder %s21, 1
      %s367 = scalar_select %p366, %s21, 1
      %s368 = scalar_lea.vmem %s1, %s367
      %p369 = scmp.lt.s32.totalorder %s21, 1
      %s370 = scalar_select %p369, %s21, 1
      %s371 = smul.addr %s370, 2
      %s372 = smul.addr %s371, 8
      %s373 = scalar_lea.vmem %s10, %s372
      %v375 = vld [vmem:[%s8] sm:$0x1]
      %v376 = vld [vmem:[%s8 + $0x1] sm:$0x1]
      %v377 = vld [vmem:[%s8 + $0x2] sm:$0x1]
      %v378 = vld [vmem:[%s365] sm:$0xff]
      %v379 = vld [vmem:[%s365 + $0x8] sm:$0xff]
      %v380 = vld [vmem:[%s365 + $0x10] sm:$0xff]
      %v381 = vld [vmem:[%s365 + $0x18] sm:$0xff]
      %v382 = vpack.c.bf16 %v379, %v378
      %v383 = vpack.c.bf16 %v381, %v380
      %v384 = vld [vmem:[%s4] sm:$0xf]
      %v385 = vld [vmem:[%s4 + $0x4] sm:$0xf]
      %v386 = vld [vmem:[%s4 + $0x8] sm:$0xf]
      %v387 = vld [vmem:[%s4 + $0xc] sm:$0xf]
      %v388 = vlaneseq
      %v389 = vshrl.u32 %v388, 7
      %v390 = vsub.s32 0, %v389
      %v391 = vrot.slane %v375, %v390
      %392 = vxpose.xlu0.c.b16.start [1/8] %v382, 128
      %393 = vxpose.xlu0.c.b16.cont [2/8] %v383, 128
      %394 = vxpose.xlu0.c.b16.cont [3/8] 0, 128
      %395 = vxpose.xlu0.c.b16.cont [4/8] 0, 128
      %396 = vxpose.xlu0.c.b16.cont [5/8] 0, 128
      %397 = vxpose.xlu0.c.b16.cont [6/8] 0, 128
      %398 = vxpose.xlu0.c.b16.cont [7/8] 0, 128
      %399 = vxpose.xlu0.c.b16.end [8/8] 0, 128
      %v400 = vpop.trf.xlu0
      %v401 = vpop.trf.xlu0
      %v402 = vpop.trf.xlu0
      %v403 = vpop.trf.xlu0
      %v404 = vpop.trf.xlu0
      %v405 = vpop.trf.xlu0
      %v406 = vpop.trf.xlu0
      %v407 = vpop.trf.xlu0
      %v412 = vunpack.c.l.b16 %v384
      %v413 = vunpack.c.l.b16 %v385
      %v414 = vunpack.c.l.b16 %v386
      %v415 = vunpack.c.l.b16 %v387
      %v416 = vpack.c.b16 %v413, %v412
      %v417 = vpack.c.b16 %v415, %v414
      %vm420 = vcmask 261120
      %v422 = vsel %vm420, %v400, 0
      %v425 = vsel %vm420, %v401, 0
      %v428 = vsel %vm420, %v402, 0
      %v431 = vsel %vm420, %v403, 0
      %433 = vmatprep.subr.bf16.mxu0 0
      %434 = vmatpush1.bf16.msra.mxu0 %v416
      %435 = vmatprep.subr.bf16.mxu0 0
      %436 = vmatpush1.bf16.msra.mxu0 %v417
      %437 = vmatprep.subr.bf16.mxu0 0
      %438 = vmatpush1.bf16.msra.mxu0 0
      %439 = vmatprep.subr.bf16.mxu0 0
      %440 = vmatpush1.bf16.msra.mxu0 0
      %441 = vmatprep.subr.bf16.mxu0 0
      %442 = vmatpush1.bf16.msra.mxu0 0
      %443 = vmatprep.subr.bf16.mxu0 0
      %444 = vmatpush1.bf16.msra.mxu0 0
      %445 = vmatprep.subr.bf16.mxu0 0
      %446 = vmatpush1.bf16.msra.mxu0 0
      %447 = vmatprep.subr.bf16.mxu0 0
      %448 = vmatpush1.bf16.msra.mxu0 0
      %449 = vmatprep.subr.bf16.mxu0 0
      %450 = vmatpush1.bf16.msra.mxu0 0
      %451 = vmatprep.subr.bf16.mxu0 0
      %452 = vmatpush1.bf16.msra.mxu0 0
      %453 = vmatprep.subr.bf16.mxu0 0
      %454 = vmatpush1.bf16.msra.mxu0 0
      %455 = vmatprep.subr.bf16.mxu0 0
      %456 = vmatpush1.bf16.msra.mxu0 0
      %457 = vmatprep.subr.bf16.mxu0 0
      %458 = vmatpush1.bf16.msra.mxu0 0
      %459 = vmatprep.subr.bf16.mxu0 0
      %460 = vmatpush1.bf16.msra.mxu0 0
      %461 = vmatprep.subr.bf16.mxu0 0
      %462 = vmatpush1.bf16.msra.mxu0 0
      %463 = vmatprep.subr.bf16.mxu0 0
      %464 = vmatpush1.bf16.msra.mxu0 0
      %465 = vmatprep.mubr.bf16.mxu0 0
      %466 = vmatmul.mubr.bf16.gmra.mrb[0].mxu0 %v422
      %v467 = vpop.f32.mrb[0].mxu0
      %v468 = vadd.f32 %v391, %v467
      %v469 = vpop.f32.mrb[0].mxu0
      %v470 = vpop.f32.mrb[0].mxu0
      %v471 = vadd.f32 %v391, %v470
      %v472 = vpop.f32.mrb[0].mxu0
      %473 = vmatprep.mubr.bf16.mxu0 0
      %474 = vmatmul.mubr.bf16.gmra.mrb[0].mxu0 %v425
      %v475 = vpop.f32.mrb[0].mxu0
      %v476 = vadd.f32 %v391, %v475
      %v477 = vpop.f32.mrb[0].mxu0
      %v478 = vpop.f32.mrb[0].mxu0
      %v479 = vadd.f32 %v391, %v478
      %v480 = vpop.f32.mrb[0].mxu0
      %481 = vmatprep.mubr.bf16.mxu0 0
      %482 = vmatmul.mubr.bf16.gmra.mrb[0].mxu0 %v428
      %v483 = vpop.f32.mrb[0].mxu0
      %v484 = vadd.f32 %v391, %v483
      %v485 = vpop.f32.mrb[0].mxu0
      %v486 = vpop.f32.mrb[0].mxu0
      %v487 = vadd.f32 %v391, %v486
      %v488 = vpop.f32.mrb[0].mxu0
      %489 = vmatprep.mubr.bf16.mxu0 0
      %490 = vmatmul.mubr.bf16.gmra.mrb[0].mxu0 %v431
      %v491 = vpop.f32.mrb[0].mxu0
      %v492 = vadd.f32 %v391, %v491
      %v493 = vpop.f32.mrb[0].mxu0
      %v494 = vpop.f32.mrb[0].mxu0
      %v495 = vadd.f32 %v391, %v494
      %v496 = vpop.f32.mrb[0].mxu0
      %497 = vdwg.mxu0
      %v498 = vmul.f32 %v468, 0.5
      %v499 = vmul.f32 %v471, 0.5
      %v500 = vmul.f32 %v476, 0.5
      %v501 = vmul.f32 %v479, 0.5
      %v502 = vmul.f32 %v484, 0.5
      %v503 = vmul.f32 %v487, 0.5
      %v504 = vmul.f32 %v492, 0.5
      %v505 = vmul.f32 %v495, 0.5
      %v506 = vrcp.pop 1.4142135
      %v507 = vmul.f32 %v468, %v506
      %v508 = vmul.f32 %v471, %v506
      %v509 = vmul.f32 %v476, %v506
      %v510 = vmul.f32 %v479, %v506
      %v511 = vmul.f32 %v484, %v506
      %v512 = vmul.f32 %v487, %v506
      %v513 = vmul.f32 %v492, %v506
      %v514 = vmul.f32 %v495, %v506
      %v515 = verf.f32.pop %v507
      %v516 = verf.f32.pop %v508
      %v517 = verf.f32.pop %v509
      %v518 = verf.f32.pop %v510
      %v519 = verf.f32.pop %v511
      %v520 = verf.f32.pop %v512
      %v521 = verf.f32.pop %v513
      %v522 = verf.f32.pop %v514
      %v523 = vadd.f32 %v515, 1.0
      %v524 = vadd.f32 %v516, 1.0
      %v525 = vadd.f32 %v517, 1.0
      %v526 = vadd.f32 %v518, 1.0
      %v527 = vadd.f32 %v519, 1.0
      %v528 = vadd.f32 %v520, 1.0
      %v529 = vadd.f32 %v521, 1.0
      %v530 = vadd.f32 %v522, 1.0
      %v531 = vmul.f32 %v498, %v523
      %v532 = vmul.f32 %v499, %v524
      %v533 = vmul.f32 %v500, %v525
      %v534 = vmul.f32 %v501, %v526
      %v535 = vmul.f32 %v502, %v527
      %v536 = vmul.f32 %v503, %v528
      %v537 = vmul.f32 %v504, %v529
      %v538 = vmul.f32 %v505, %v530
      %539 = vst.msk [vmem:[#allocation2] sm:$0xff] %vm420, %v531
      %540 = vst.msk [vmem:[#allocation2 + $0x8] sm:$0xff] %vm420, %v532
      %541 = vst.msk [vmem:[#allocation2 + $0x10] sm:$0xff] %vm420, %v533
      %542 = vst.msk [vmem:[#allocation2 + $0x18] sm:$0xff] %vm420, %v534
      %543 = vst.msk [vmem:[#allocation2 + $0x20] sm:$0xff] %vm420, %v535
      %544 = vst.msk [vmem:[#allocation2 + $0x28] sm:$0xff] %vm420, %v536
      %545 = vst.msk [vmem:[#allocation2 + $0x30] sm:$0xff] %vm420, %v537
      %546 = vst.msk [vmem:[#allocation2 + $0x38] sm:$0xff] %vm420, %v538
      %v547 = vld [vmem:[#allocation2] ss:$4 sm:$0xff]
      %s548 = scalar_lea.vmem [#allocation2], 32
      %v549 = vld [vmem:[%s548] ss:$4 sm:$0xff]
      %s550 = scalar_lea.vmem [#allocation2], 1
      %v551 = vld [vmem:[%s550] ss:$4 sm:$0xff]
      %s552 = scalar_lea.vmem [#allocation2], 33
      %v553 = vld [vmem:[%s552] ss:$4 sm:$0xff]
      %v554 = vadd.f32 %v547, %v551
      %v555 = vadd.f32 %v549, %v553
      %s556 = scalar_lea.vmem [#allocation2], 2
      %v557 = vld [vmem:[%s556] ss:$4 sm:$0xff]
      %s558 = scalar_lea.vmem [#allocation2], 34
      %v559 = vld [vmem:[%s558] ss:$4 sm:$0xff]
      %v560 = vadd.f32 %v554, %v557
      %v561 = vadd.f32 %v555, %v559
      %s562 = scalar_lea.vmem [#allocation2], 3
      %v563 = vld [vmem:[%s562] ss:$4 sm:$0xff]
      %s564 = scalar_lea.vmem [#allocation2], 35
      %v565 = vld [vmem:[%s564] ss:$4 sm:$0xff]
      %v566 = vadd.f32 %v560, %v563
      %v567 = vadd.f32 %v561, %v565
      %v568 = vmul.f32 %v566, 0.25
      %v569 = vmul.f32 %v567, 0.25
      %570 = vst.msk [vmem:[#allocation3] sm:$0xff] %vm420, %v568
      %571 = vst.msk [vmem:[#allocation3 + $0x8] sm:$0xff] %vm420, %v569
      %v572 = vld [vmem:[#allocation3] sm:$0xff]
      %v573 = vld [vmem:[#allocation3 + $0x8] sm:$0xff]
      %v574 = vld [vmem:[%s2] sm:$0xff]
      %v575 = vld [vmem:[%s2 + $0x8] sm:$0xff]
      %v576 = vld [vmem:[%s3] sm:$0xff]
      %v577 = vld [vmem:[%s3 + $0x8] sm:$0xff]
      %v578 = vpack.c.bf16 %v573, %v572
      %v579 = vld [vmem:[%s5] sm:$0xf]
      %v580 = vld [vmem:[%s5 + $0x4] sm:$0xf]
      %v581 = vld [vmem:[%s5 + $0x8] sm:$0xf]
      %v582 = vld [vmem:[%s5 + $0xc] sm:$0xf]
      %v587 = vunpack.c.l.b16 %v579
      %v588 = vunpack.c.l.b16 %v580
      %v589 = vunpack.c.l.b16 %v581
      %v590 = vunpack.c.l.b16 %v582
      %v591 = vpack.c.b16 %v588, %v587
      %v592 = vpack.c.b16 %v590, %v589
      %v596 = vsel %vm420, %v578, 0
      %598 = vmatprep.subr.bf16.mxu0 0
      %599 = vmatpush1.bf16.msra.mxu0 %v591
      %600 = vmatprep.subr.bf16.mxu0 0
      %601 = vmatpush1.bf16.msra.mxu0 %v592
      %602 = vmatprep.subr.bf16.mxu0 0
      %603 = vmatpush1.bf16.msra.mxu0 0
      %604 = vmatprep.subr.bf16.mxu0 0
      %605 = vmatpush1.bf16.msra.mxu0 0
      %606 = vmatprep.subr.bf16.mxu0 0
      %607 = vmatpush1.bf16.msra.mxu0 0
      %608 = vmatprep.subr.bf16.mxu0 0
      %609 = vmatpush1.bf16.msra.mxu0 0
      %610 = vmatprep.subr.bf16.mxu0 0
      %611 = vmatpush1.bf16.msra.mxu0 0
      %612 = vmatprep.subr.bf16.mxu0 0
      %613 = vmatpush1.bf16.msra.mxu0 0
      %614 = vmatprep.subr.bf16.mxu0 0
      %615 = vmatpush1.bf16.msra.mxu0 0
      %616 = vmatprep.subr.bf16.mxu0 0
      %617 = vmatpush1.bf16.msra.mxu0 0
      %618 = vmatprep.subr.bf16.mxu0 0
      %619 = vmatpush1.bf16.msra.mxu0 0
      %620 = vmatprep.subr.bf16.mxu0 0
      %621 = vmatpush1.bf16.msra.mxu0 0
      %622 = vmatprep.subr.bf16.mxu0 0
      %623 = vmatpush1.bf16.msra.mxu0 0
      %624 = vmatprep.subr.bf16.mxu0 0
      %625 = vmatpush1.bf16.msra.mxu0 0
      %626 = vmatprep.subr.bf16.mxu0 0
      %627 = vmatpush1.bf16.msra.mxu0 0
      %628 = vmatprep.subr.bf16.mxu0 0
      %629 = vmatpush1.bf16.msra.mxu0 0
      %630 = vmatprep.mubr.bf16.mxu0 0
      %631 = vmatmul.mubr.bf16.gmra.mrb[0].mxu0 %v596
      %v632 = vpop.f32.mrb[0].mxu0
      %v633 = vadd.f32 0.0, %v632
      %v634 = vpop.f32.mrb[0].mxu0
      %v635 = vpop.f32.mrb[0].mxu0
      %v636 = vadd.f32 0.0, %v635
      %v637 = vpop.f32.mrb[0].mxu0
      %638 = vdwg.mxu0
      %v639 = vadd.f32 %v576, %v633
      %v640 = vadd.f32 %v577, %v636
      %v641 = vxor.u32 %v639, 2147483648
      %v642 = vxor.u32 %v640, 2147483648
      %v643 = vmul.f32 %v641, 1.442695
      %v644 = vpow.pop %v643
      %v645 = vmul.f32 %v642, 1.442695
      %v646 = vpow.pop %v645
      %v647 = vadd.f32 %v644, 1.0
      %v648 = vadd.f32 %v646, 1.0
      %v649 = vrcp.pop %v647
      %v650 = vmul.f32 1.0, %v649
      %v651 = vrcp.pop %v648
      %v652 = vmul.f32 1.0, %v651
      %v653 = vmul.f32 %v650, %v574
      %v654 = vmul.f32 %v652, %v575
      %v655 = vsub.f32 1.0, %v650
      %v656 = vsub.f32 1.0, %v652
      %v657 = vmul.f32 %v655, %v572
      %v658 = vmul.f32 %v656, %v573
      %v659 = vadd.f32 %v653, %v657
      %v660 = vadd.f32 %v654, %v658
      %v661 = vpack.c.bf16 %v660, %v659
      %v662 = vld [vmem:[%s6] sm:$0xf]
      %v663 = vld [vmem:[%s6 + $0x4] sm:$0xf]
      %v664 = vld [vmem:[%s6 + $0x8] sm:$0xf]
      %v665 = vld [vmem:[%s6 + $0xc] sm:$0xf]
      %v666 = vld [vmem:[%s368] sm:$0x1]
      %v668 = vlaneseq
      %v669 = vshrl.u32 %v668, 7
      %v670 = vsub.s32 0, %v669
      %v671 = vrot.slane %v666, %v670
      %v677 = vunpack.c.l.b16 %v662
      %v678 = vunpack.c.l.b16 %v663
      %v679 = vunpack.c.l.b16 %v664
      %v680 = vunpack.c.l.b16 %v665
      %v681 = vpack.c.b16 %v678, %v677
      %v682 = vpack.c.b16 %v680, %v679
      %v686 = vsel %vm420, %v661, 0
      %688 = vmatprep.subr.bf16.mxu0 0
      %689 = vmatpush1.bf16.msra.mxu0 %v681
      %690 = vmatprep.subr.bf16.mxu0 0
      %691 = vmatpush1.bf16.msra.mxu0 %v682
      %692 = vmatprep.subr.bf16.mxu0 0
      %693 = vmatpush1.bf16.msra.mxu0 0
      %694 = vmatprep.subr.bf16.mxu0 0
      %695 = vmatpush1.bf16.msra.mxu0 0
      %696 = vmatprep.subr.bf16.mxu0 0
      %697 = vmatpush1.bf16.msra.mxu0 0
      %698 = vmatprep.subr.bf16.mxu0 0
      %699 = vmatpush1.bf16.msra.mxu0 0
      %700 = vmatprep.subr.bf16.mxu0 0
      %701 = vmatpush1.bf16.msra.mxu0 0
      %702 = vmatprep.subr.bf16.mxu0 0
      %703 = vmatpush1.bf16.msra.mxu0 0
      %704 = vmatprep.subr.bf16.mxu0 0
      %705 = vmatpush1.bf16.msra.mxu0 0
      %706 = vmatprep.subr.bf16.mxu0 0
      %707 = vmatpush1.bf16.msra.mxu0 0
      %708 = vmatprep.subr.bf16.mxu0 0
      %709 = vmatpush1.bf16.msra.mxu0 0
      %710 = vmatprep.subr.bf16.mxu0 0
      %711 = vmatpush1.bf16.msra.mxu0 0
      %712 = vmatprep.subr.bf16.mxu0 0
      %713 = vmatpush1.bf16.msra.mxu0 0
      %714 = vmatprep.subr.bf16.mxu0 0
      %715 = vmatpush1.bf16.msra.mxu0 0
      %716 = vmatprep.subr.bf16.mxu0 0
      %717 = vmatpush1.bf16.msra.mxu0 0
      %718 = vmatprep.subr.bf16.mxu0 0
      %719 = vmatpush1.bf16.msra.mxu0 0
      %720 = vmatprep.mubr.bf16.mxu0 0
      %721 = vmatmul.mubr.bf16.gmra.mrb[0].mxu0 %v686
      %v722 = vpop.f32.mrb[0].mxu0
      %v723 = vadd.f32 %v671, %v722
      %v724 = vpop.f32.mrb[0].mxu0
      %v725 = vpop.f32.mrb[0].mxu0
      %v726 = vadd.f32 %v671, %v725
      %v727 = vpop.f32.mrb[0].mxu0
      %728 = vdwg.mxu0
      %v729 = vsel %vm420, %v723, 0.0
      %730 = vadd.xlane.f32.xlu0 %v729
      %v731 = vpop.xlane.xlu0 %730
      %v732 = vsel %vm420, %v726, 0.0
      %733 = vadd.xlane.f32.xlu0 %v732
      %v734 = vpop.xlane.xlu0 %733
      %v735 = vrcp.pop 32.0
      %v736 = vmul.f32 %v731, %v735
      %v737 = vmul.f32 %v734, %v735
      %v738 = vsub.f32 %v723, %v736
      %v739 = vsub.f32 %v726, %v737
      %v740 = vmul.f32 %v738, %v738
      %v741 = vmul.f32 %v739, %v739
      %v742 = vsel %vm420, %v740, 0.0
      %743 = vadd.xlane.f32.xlu0 %v742
      %v744 = vpop.xlane.xlu0 %743
      %v745 = vsel %vm420, %v741, 0.0
      %746 = vadd.xlane.f32.xlu0 %v745
      %v747 = vpop.xlane.xlu0 %746
      %v748 = vmul.f32 %v744, %v735
      %v749 = vmul.f32 %v747, %v735
      %v750 = vadd.f32 %v748, 1e-05
      %v751 = vadd.f32 %v749, 1e-05
      %v752 = vrsqrt.pop %v750
      %v753 = vrsqrt.pop %v751
      %v754 = vmul.f32 %v738, %v752
      %v755 = vmul.f32 %v739, %v753
      %v756 = vlaneseq
      %v757 = vshrl.u32 %v756, 7
      %v758 = vsub.s32 0, %v757
      %v759 = vrot.slane %v376, %v758
      %v760 = vmul.f32 %v754, %v759
      %v761 = vmul.f32 %v755, %v759
      %v762 = vlaneseq
      %v763 = vshrl.u32 %v762, 7
      %v764 = vsub.s32 0, %v763
      %v765 = vrot.slane %v377, %v764
      %v766 = vadd.f32 %v760, %v765
      %v767 = vadd.f32 %v761, %v765
      %v768 = vmul.f32 %v766, 0.5
      %v769 = vmul.f32 %v767, 0.5
      %v770 = vmul.f32 %v766, %v506
      %v771 = vmul.f32 %v767, %v506
      %v772 = verf.f32.pop %v770
      %v773 = verf.f32.pop %v771
      %v774 = vadd.f32 %v772, 1.0
      %v775 = vadd.f32 %v773, 1.0
      %v776 = vmul.f32 %v768, %v774
      %v777 = vmul.f32 %v769, %v775
      %v778 = vpack.c.bf16 %v777, %v776
      %v779 = vld [vmem:[%s7] sm:$0xf]
      %v780 = vld [vmem:[%s7 + $0x4] sm:$0xf]
      %v781 = vld [vmem:[%s7 + $0x8] sm:$0xf]
      %v782 = vld [vmem:[%s7 + $0xc] sm:$0xf]
      %v783 = vld [vmem:[%s9] sm:$0x1]
      %v785 = vlaneseq
      %v786 = vshrl.u32 %v785, 7
      %v787 = vsub.s32 0, %v786
      %v788 = vrot.slane %v783, %v787
      %v794 = vunpack.c.l.b16 %v779
      %v795 = vunpack.c.l.b16 %v780
      %v796 = vunpack.c.l.b16 %v781
      %v797 = vunpack.c.l.b16 %v782
      %v798 = vpack.c.b16 %v795, %v794
      %v799 = vpack.c.b16 %v797, %v796
      %v803 = vsel %vm420, %v778, 0
      %805 = vmatprep.subr.bf16.mxu0 0
      %806 = vmatpush1.bf16.msra.mxu0 %v798
      %807 = vmatprep.subr.bf16.mxu0 0
      %808 = vmatpush1.bf16.msra.mxu0 %v799
      %809 = vmatprep.subr.bf16.mxu0 0
      %810 = vmatpush1.bf16.msra.mxu0 0
      %811 = vmatprep.subr.bf16.mxu0 0
      %812 = vmatpush1.bf16.msra.mxu0 0
      %813 = vmatprep.subr.bf16.mxu0 0
      %814 = vmatpush1.bf16.msra.mxu0 0
      %815 = vmatprep.subr.bf16.mxu0 0
      %816 = vmatpush1.bf16.msra.mxu0 0
      %817 = vmatprep.subr.bf16.mxu0 0
      %818 = vmatpush1.bf16.msra.mxu0 0
      %819 = vmatprep.subr.bf16.mxu0 0
      %820 = vmatpush1.bf16.msra.mxu0 0
      %821 = vmatprep.subr.bf16.mxu0 0
      %822 = vmatpush1.bf16.msra.mxu0 0
      %823 = vmatprep.subr.bf16.mxu0 0
      %824 = vmatpush1.bf16.msra.mxu0 0
      %825 = vmatprep.subr.bf16.mxu0 0
      %826 = vmatpush1.bf16.msra.mxu0 0
      %827 = vmatprep.subr.bf16.mxu0 0
      %828 = vmatpush1.bf16.msra.mxu0 0
      %829 = vmatprep.subr.bf16.mxu0 0
      %830 = vmatpush1.bf16.msra.mxu0 0
      %831 = vmatprep.subr.bf16.mxu0 0
      %832 = vmatpush1.bf16.msra.mxu0 0
      %833 = vmatprep.subr.bf16.mxu0 0
      %834 = vmatpush1.bf16.msra.mxu0 0
      %835 = vmatprep.subr.bf16.mxu0 0
      %836 = vmatpush1.bf16.msra.mxu0 0
      %837 = vmatprep.mubr.bf16.mxu0 0
      %838 = vmatmul.mubr.bf16.gmra.mrb[0].mxu0 %v803
      %v839 = vpop.f32.mrb[0].mxu0
      %v840 = vadd.f32 %v788, %v839
      %v841 = vpop.f32.mrb[0].mxu0
      %v842 = vpop.f32.mrb[0].mxu0
      %v843 = vadd.f32 %v788, %v842
      %v844 = vpop.f32.mrb[0].mxu0
      %845 = vdwg.mxu0
      %vm846 = vcmask 31744
      %847 = vst.msk [vmem:[%s373] sm:$0xff] %vm846, %v840
      %848 = vst.msk [vmem:[%s373 + $0x8] sm:$0xff] %vm846, %v843
      %p849 = scmp.lt.s32.totalorder %s21, 1
      %s850 = scalar_select %p849, %s21, 1
      %s851 = smul.addr %s850, 2
      %s852 = smul.addr %s851, 8
      %s853 = scalar_lea.vmem %s10, %s852
      // Predicated region
      $region61: #{_run.1} parent=59 // pred_check
        %p854 = pneg %p259
      $region62: #{_run.1} parent=59 // pred_check_branch
        %856 = sbr.rel (%p854) target = $region64
      $region63: #{_run.1} parent=59 // pred_region
        _
      $region64: #{_run.1} parent=59 // pred_fallthru
        _
    $region60: #{_run.1} parent=5 // pred_fallthru
      _
    %p857 = scmp.le.s32.totalorder 2, %s16
    // Predicated region
    $region65: #{_run.1} parent=5 // pred_check
      %p858 = pneg %p857
    $region66: #{_run.1} parent=5 // pred_check_branch
      %860 = sbr.rel (%p858) target = $region68
    $region67: #{_run.1} parent=5 // pred_region
      %s861 = ssub.s32 %s16, 2
      // Predicated region
      $region69: #{_run.1} parent=67 // pred_check
        %p862 = pneg %p265
      $region70: #{_run.1} parent=67 // pred_check_branch
        %864 = sbr.rel (%p862) target = $region72
      $region71: #{_run.1} parent=67 // pred_region
        %p865 = scmp.lt.s32.totalorder %s22, 1
        %s866 = scalar_select %p865, %s22, 1
        %s867 = smul.addr %s866, 2
        %s868 = smul.addr %s867, 8
        %s869 = scalar_lea.vmem %s10, %s868
      $region72: #{_run.1} parent=67 // pred_fallthru
        _
    $region68: #{_run.1} parent=5 // pred_fallthru
      _
  $region6: #{_run.1} parent=0 // loop_footer
    %s20 = sadd.s32 1, %s16
  $region7: #{_run.1} parent=0 // loop_footer_branch
    %15 = sbr.rel target = $region3
  $region8: #{_run.1} parent=0 // loop_exit
    _

</llo_original>
